<compile_context>
chip_gen: v7x
topology: tpu7x:2x2x1
jax: 0.10.0
libtpu: 0.0.40
codegen_flags: <defaults>
</compile_context>

<pallas_src>
import jax
import jax.numpy as jnp
from jax import lax
from jax.experimental import pallas as pl
from jax.experimental.pallas import tpu as pltpu


def _choose_hw_tile(hw, c, itemsize, target_bytes=8 * 1024 * 1024):
    """Spatial tile: multiple of 128 (or full extent), sized to ~target_bytes per (C, tile) block."""
    if hw <= 128:
        return hw                                   # single full-extent block (exempt from 128 rule)
    cap = max(128, (target_bytes // max(1, c * itemsize)) // 128 * 128)
    hw_floor = (hw // 128) * 128                    # largest 128-multiple not exceeding hw
    if hw % 128 == 0 and hw <= cap:
        return hw                                   # whole row in one block, no masking needed
    return min(cap, hw_floor)


def classer_new(x_nchw, w_list, b_list, div_class):
    """x_nchw: (B, C, H, W). w_list[i]: (d_i, C), b_list[i]: (d_i,).

    Returns [softmax(mean_hw(x) @ w_i.T + b_i, axis=1) for i], matching the PyTorch module
    (like the PyTorch code, this assumes B > 1 so .squeeze() keeps the batch dim).
    """
    B, C, H, W = x_nchw.shape
    HW = H * W
    div_class = tuple(int(d) for d in div_class)
    D = int(sum(div_class))
    itemsize = jnp.dtype(x_nchw.dtype).itemsize

    # NCHW -> (B, C, HW): pure reshape, no HBM data movement.
    x = x_nchw.reshape(B, C, HW)
    # Concatenated heads; 1/HW folded into the weights so the kernel accumulates a plain sum.
    inv_hw = jnp.float32(1.0 / float(HW))
    w_cat = jnp.concatenate([w.astype(jnp.float32) for w in w_list], axis=0) * inv_hw   # (D, C)
    b_cat = jnp.concatenate([b.astype(jnp.float32) for b in b_list], axis=0).reshape(D, 1)

    hw_tile = _choose_hw_tile(HW, C, itemsize)
    n_tiles = pl.cdiv(HW, hw_tile)
    needs_mask = (HW % hw_tile) != 0

    def kernel(x_ref, w_ref, b_ref, o_ref, acc_ref):
        # x_ref: (1, C, hw_tile) one batch, one spatial tile (channels=sublanes, HW=lanes)
        # w_ref: (D, C) concatenated (pre-scaled) head weights ; b_ref: (D, 1) biases
        # o_ref: (1, D, 1) per-batch head outputs ; acc_ref: (C, 1) f32 pooled-sum accumulator
        t = pl.program_id(1)

        @pl.when(t == 0)
        def _():
            acc_ref[...] = jnp.zeros_like(acc_ref)

        xt = x_ref[0]                                                   # (C, hw_tile), native dtype
        if needs_mask:
            # Zero the out-of-range lanes of the (possibly partial) block; VPU work is hidden
            # under the HBM DMA that this kernel is bound by.
            col = lax.broadcasted_iota(jnp.int32, (C, hw_tile), 1) + t * hw_tile
            xt = jnp.where(col < HW, xt, jnp.zeros((), xt.dtype))
        ones_col = jnp.ones((hw_tile, 1), dtype=xt.dtype)
        # Spatial partial sum as an MXU matvec in the native dtype (single MXU pass for bf16),
        # accumulated in f32; keeps VALU/XLU slots free.
        acc_ref[...] += jnp.dot(xt, ones_col, preferred_element_type=jnp.float32)

        @pl.when(t == pl.num_programs(1) - 1)
        def _():
            # acc holds sum over HW; 1/HW already folded into w_ref.
            logits = jnp.dot(w_ref[...], acc_ref[...],
                             preferred_element_type=jnp.float32) + b_ref[...]       # (D, 1)
            # Per-head (segmented) softmax along sublanes; segments are static, and each head
            # is stored directly into its output slice (no in-kernel concatenate).
            off = 0
            for d in div_class:
                seg = logits[off:off + d, :]
                m = jnp.max(seg, axis=0, keepdims=True)
                e = jnp.exp(seg - m)
                o_ref[0, off:off + d, :] = (e / jnp.sum(e, axis=0, keepdims=True)
                                            ).astype(o_ref.dtype)
                off += d

    # VMEM budget: 2x double-buffered x block + small constant/output buffers + headroom,
    # floored at the 32 MiB default (never regresses) and capped at 48 MiB (safe on v7x 64 MiB/TC).
    x_block_bytes = C * hw_tile * itemsize
    vmem_limit = int(min(48 * 1024 * 1024,
                         max(32 * 1024 * 1024,
                             2 * x_block_bytes + 2 * (D * C * 4) + 8 * 1024 * 1024)))

    cost = pl.CostEstimate(
        flops=int(2 * B * C * HW + 2 * B * D * C),
        transcendentals=int(B * D),
        bytes_accessed=int(B * C * HW * itemsize + D * C * 4 + D * 4 + B * D * 4),
    )

    out = pl.pallas_call(
        kernel,
        out_shape=jax.ShapeDtypeStruct((B, D, 1), jnp.float32),
        grid_spec=pltpu.PrefetchScalarGridSpec(
            num_scalar_prefetch=0,
            grid=(B, n_tiles),
            in_specs=[
                pl.BlockSpec((1, C, hw_tile), lambda b, t: (b, 0, t)),
                pl.BlockSpec((D, C), lambda b, t: (0, 0)),
                pl.BlockSpec((D, 1), lambda b, t: (0, 0)),
            ],
            out_specs=pl.BlockSpec((1, D, 1), lambda b, t: (b, 0, 0)),
            scratch_shapes=[pltpu.VMEM((C, 1), jnp.float32)],
        ),
        compiler_params=pltpu.CompilerParams(
            dimension_semantics=("parallel", "arbitrary"),
            vmem_limit_bytes=vmem_limit),
        cost_estimate=cost,
    )(x, w_cat, b_cat)

    out2d = out.reshape(B, D)
    res = []
    off = 0
    for d in div_class:
        res.append(out2d[:, off:off + d])
        off += d
    return res


def _reference(x_nchw, w_list, b_list):
    """Pure-JAX reference mirroring the PyTorch module (for verification)."""
    pooled = jnp.mean(x_nchw.astype(jnp.float32), axis=(2, 3))    # gap + squeeze -> (B, C)
    res = []
    for w, b in zip(w_list, b_list):
        logits = pooled @ w.astype(jnp.float32).T + b.astype(jnp.float32)
        res.append(jax.nn.softmax(logits, axis=1))
    return res


if __name__ == "__main__":
    # Small shapes consistent with the module (in_channel default is 2048; 256 keeps it small
    # but TPU-layout friendly). div_class heads of sizes [1, 1, 3] (the module default).
    B, C, H, W = 2, 256, 16, 16
    div_class = (1, 1, 3)

    key = jax.random.PRNGKey(0)
    keys = jax.random.split(key, 1 + 2 * len(div_class))
    x = jax.random.normal(keys[0], (B, C, H, W), dtype=jnp.float32)
    w_list, b_list = [], []
    for i, d in enumerate(div_class):
        w_list.append(jax.random.normal(keys[1 + 2 * i], (d, C), dtype=jnp.float32) * 0.1)
        b_list.append(jax.random.normal(keys[2 + 2 * i], (d,), dtype=jnp.float32) * 0.1)

    outs = classer_new(x, w_list, b_list, div_class)
    outs = jax.block_until_ready(outs)

    refs = jax.block_until_ready(_reference(x, w_list, b_list))
    assert len(outs) == len(div_class)
    for o, r, d in zip(outs, refs, div_class):
        assert o.shape == (B, d)
        assert jnp.allclose(o, r, atol=1e-5, rtol=1e-5)

    print("KERNEL_OK")
</pallas_src>

<mosaic_0001>
module attributes {stable_mosaic.version = 11 : i64} {
  func.func @kernel(%arg0: i32, %arg1: i32, %arg2: memref<1x256x256xf32, #tpu.memory_space<vmem>>, %arg3: memref<5x256xf32, #tpu.memory_space<vmem>>, %arg4: memref<5x1xf32, #tpu.memory_space<vmem>>, %arg5: memref<1x5x1xf32, #tpu.memory_space<vmem>>, %arg6: memref<256x1xf32, #tpu.memory_space<vmem>>) attributes {dimension_semantics = [#tpu.dimension_semantics<parallel>, #tpu.dimension_semantics<arbitrary>], iteration_bounds = array<i64: 2, 1>, scalar_prefetch = 0 : i64, scratch_operands = 1 : i64, tpu.core_type = #tpu.core_type<tc>, window_params = [{transform_indices = @transform_0, window_bounds = array<i64: 1, 256, 256>}, {pipeline_mode = #tpu.pipeline_mode<synchronous>, transform_indices = @transform_1, window_bounds = array<i64: 5, 256>}, {pipeline_mode = #tpu.pipeline_mode<synchronous>, transform_indices = @transform_2, window_bounds = array<i64: 5, 1>}, {transform_indices = @transform_3, window_bounds = array<i64: 1, 5, 1>}]} {
    %c0_i32 = arith.constant 0 : i32
    %0 = arith.cmpi eq, %arg1, %c0_i32 : i32
    %1 = arith.extui %0 : i1 to i32
    %c0_i32_0 = arith.constant 0 : i32
    %2 = arith.cmpi ne, %1, %c0_i32_0 : i32
    scf.if %2 {
      %cst_10 = arith.constant 0.000000e+00 : f32
      %13 = vector.broadcast %cst_10 : f32 to vector<256x1xf32>
      %c0_11 = arith.constant 0 : index
      %c0_12 = arith.constant 0 : index
      %14 = vector.load %arg6[%c0_11, %c0_12] : memref<256x1xf32, #tpu.memory_space<vmem>>, vector<256x1xf32>
      tpu.vector_store %arg6[%c0_11, %c0_12], %13 {strides = array<i32>} : memref<256x1xf32, #tpu.memory_space<vmem>>, vector<256x1xf32>,
    } else {
    }
    %c0 = arith.constant 0 : index
    %c0_1 = arith.constant 0 : index
    %c0_2 = arith.constant 0 : index
    %3 = vector.load %arg2[%c0, %c0_1, %c0_2] : memref<1x256x256xf32, #tpu.memory_space<vmem>>, vector<1x256x256xf32>
    %4 = vector.shape_cast %3 : vector<1x256x256xf32> to vector<256x256xf32>
    %cst = arith.constant 1.000000e+00 : f32
    %5 = vector.broadcast %cst : f32 to vector<256x1xf32>
    %c0_3 = arith.constant 0 : index
    %c0_4 = arith.constant 0 : index
    %6 = vector.load %arg6[%c0_3, %c0_4] : memref<256x1xf32, #tpu.memory_space<vmem>>, vector<256x1xf32>
    %cst_5 = arith.constant dense<0.000000e+00> : vector<256x1xf32>
    %7 = tpu.matmul %4, %5, %cst_5 {dimension_numbers = #tpu.dot_dimension_numbers<[1], [0], [0], [1], [0, 0, 1, 1], [], []>} : vector<256x256xf32>, vector<256x1xf32>, vector<256x1xf32> -> vector<256x1xf32>
    %8 = arith.addf %6, %7 : vector<256x1xf32>
    %c0_6 = arith.constant 0 : index
    %c0_7 = arith.constant 0 : index
    %9 = vector.load %arg6[%c0_6, %c0_7] : memref<256x1xf32, #tpu.memory_space<vmem>>, vector<256x1xf32>
    tpu.vector_store %arg6[%c0_6, %c0_7], %8 {strides = array<i32>} : memref<256x1xf32, #tpu.memory_space<vmem>>, vector<256x1xf32>,
    %c0_i32_8 = arith.constant 0 : i32
    %10 = arith.cmpi eq, %arg1, %c0_i32_8 : i32
    %11 = arith.extui %10 : i1 to i32
    %c0_i32_9 = arith.constant 0 : i32
    %12 = arith.cmpi ne, %11, %c0_i32_9 : i32
    scf.if %12 {
      %c0_10 = arith.constant 0 : index
      %c0_11 = arith.constant 0 : index
      %13 = vector.load %arg3[%c0_10, %c0_11] : memref<5x256xf32, #tpu.memory_space<vmem>>, vector<5x256xf32>
      %c0_12 = arith.constant 0 : index
      %c0_13 = arith.constant 0 : index
      %14 = vector.load %arg6[%c0_12, %c0_13] : memref<256x1xf32, #tpu.memory_space<vmem>>, vector<256x1xf32>
      %cst_14 = arith.constant dense<0.000000e+00> : vector<5x1xf32>
      %15 = tpu.matmul %13, %14, %cst_14 {dimension_numbers = #tpu.dot_dimension_numbers<[1], [0], [0], [1], [0, 0, 1, 1], [], []>} : vector<5x256xf32>, vector<256x1xf32>, vector<5x1xf32> -> vector<5x1xf32>
      %c0_15 = arith.constant 0 : index
      %c0_16 = arith.constant 0 : index
      %16 = vector.load %arg4[%c0_15, %c0_16] : memref<5x1xf32, #tpu.memory_space<vmem>>, vector<5x1xf32>
      %17 = arith.addf %15, %16 : vector<5x1xf32>
      %18 = vector.extract_strided_slice %17 {offsets = [0, 0], sizes = [1, 1], strides = [1, 1]} : vector<5x1xf32> to vector<1x1xf32>
      %cst_17 = arith.constant dense<0xFF800000> : vector<1xf32>
      %19 = vector.multi_reduction <maximumf>, %18, %cst_17 [0] : vector<1x1xf32> to vector<1xf32>
      %20 = vector.shape_cast %19 : vector<1xf32> to vector<1x1xf32>
      %21 = arith.subf %18, %20 : vector<1x1xf32>
      %22 = math.exp %21 : vector<1x1xf32>
      %cst_18 = arith.constant dense<0.000000e+00> : vector<1xf32>
      %23 = vector.multi_reduction <add>, %22, %cst_18 [0] : vector<1x1xf32> to vector<1xf32>
      %24 = vector.shape_cast %23 : vector<1xf32> to vector<1x1xf32>
      %25 = arith.divf %22, %24 : vector<1x1xf32>
      %c0_19 = arith.constant 0 : index
      %c0_20 = arith.constant 0 : index
      %c0_21 = arith.constant 0 : index
      %26 = vector.load %arg5[%c0_19, %c0_20, %c0_21] : memref<1x5x1xf32, #tpu.memory_space<vmem>>, vector<1x1x1xf32>
      %27 = vector.shape_cast %26 : vector<1x1x1xf32> to vector<1x1xf32>
      %28 = vector.shape_cast %25 : vector<1x1xf32> to vector<1x1x1xf32>
      tpu.vector_store %arg5[%c0_19, %c0_20, %c0_21], %28 {strides = array<i32>} : memref<1x5x1xf32, #tpu.memory_space<vmem>>, vector<1x1x1xf32>,
      %29 = vector.extract_strided_slice %17 {offsets = [1, 0], sizes = [1, 1], strides = [1, 1]} : vector<5x1xf32> to vector<1x1xf32>
      %cst_22 = arith.constant dense<0xFF800000> : vector<1xf32>
      %30 = vector.multi_reduction <maximumf>, %29, %cst_22 [0] : vector<1x1xf32> to vector<1xf32>
      %31 = vector.shape_cast %30 : vector<1xf32> to vector<1x1xf32>
      %32 = arith.subf %29, %31 : vector<1x1xf32>
      %33 = math.exp %32 : vector<1x1xf32>
      %cst_23 = arith.constant dense<0.000000e+00> : vector<1xf32>
      %34 = vector.multi_reduction <add>, %33, %cst_23 [0] : vector<1x1xf32> to vector<1xf32>
      %35 = vector.shape_cast %34 : vector<1xf32> to vector<1x1xf32>
      %36 = arith.divf %33, %35 : vector<1x1xf32>
      %c0_24 = arith.constant 0 : index
      %c1 = arith.constant 1 : index
      %c0_25 = arith.constant 0 : index
      %37 = vector.load %arg5[%c0_24, %c1, %c0_25] : memref<1x5x1xf32, #tpu.memory_space<vmem>>, vector<1x1x1xf32>
      %38 = vector.shape_cast %37 : vector<1x1x1xf32> to vector<1x1xf32>
      %39 = vector.shape_cast %36 : vector<1x1xf32> to vector<1x1x1xf32>
      tpu.vector_store %arg5[%c0_24, %c1, %c0_25], %39 {strides = array<i32>} : memref<1x5x1xf32, #tpu.memory_space<vmem>>, vector<1x1x1xf32>,
      %40 = vector.extract_strided_slice %17 {offsets = [2, 0], sizes = [3, 1], strides = [1, 1]} : vector<5x1xf32> to vector<3x1xf32>
      %cst_26 = arith.constant dense<0xFF800000> : vector<1xf32>
      %41 = vector.multi_reduction <maximumf>, %40, %cst_26 [0] : vector<3x1xf32> to vector<1xf32>
      %42 = vector.shape_cast %41 : vector<1xf32> to vector<1x1xf32>
      %43 = vector.broadcast %42 : vector<1x1xf32> to vector<3x1xf32>
      %44 = arith.subf %40, %43 : vector<3x1xf32>
      %45 = math.exp %44 : vector<3x1xf32>
      %cst_27 = arith.constant dense<0.000000e+00> : vector<1xf32>
      %46 = vector.multi_reduction <add>, %45, %cst_27 [0] : vector<3x1xf32> to vector<1xf32>
      %47 = vector.shape_cast %46 : vector<1xf32> to vector<1x1xf32>
      %48 = vector.broadcast %47 : vector<1x1xf32> to vector<3x1xf32>
      %49 = arith.divf %45, %48 : vector<3x1xf32>
      %c0_28 = arith.constant 0 : index
      %c2 = arith.constant 2 : index
      %c0_29 = arith.constant 0 : index
      %50 = vector.load %arg5[%c0_28, %c2, %c0_29] : memref<1x5x1xf32, #tpu.memory_space<vmem>>, vector<1x3x1xf32>
      %51 = vector.shape_cast %50 : vector<1x3x1xf32> to vector<3x1xf32>
      %52 = vector.shape_cast %49 : vector<3x1xf32> to vector<1x3x1xf32>
      tpu.vector_store %arg5[%c0_28, %c2, %c0_29], %52 {strides = array<i32>} : memref<1x5x1xf32, #tpu.memory_space<vmem>>, vector<1x3x1xf32>,
    } else {
    }
    return
  }
  func.func @transform_0(%arg0: i32, %arg1: i32) -> (i32, i32, i32) {
    %c0_i32 = arith.constant 0 : i32
    %c0_i32_0 = arith.constant 0 : i32
    return %arg0, %c0_i32, %arg1 : i32, i32, i32
  }
  func.func @transform_1(%arg0: i32, %arg1: i32) -> (i32, i32) {
    %c0_i32 = arith.constant 0 : i32
    %c0_i32_0 = arith.constant 0 : i32
    %c0_i32_1 = arith.constant 0 : i32
    return %c0_i32, %c0_i32_0 : i32, i32
  }
  func.func @transform_2(%arg0: i32, %arg1: i32) -> (i32, i32) {
    %c0_i32 = arith.constant 0 : i32
    %c0_i32_0 = arith.constant 0 : i32
    %c0_i32_1 = arith.constant 0 : i32
    return %c0_i32, %c0_i32_0 : i32, i32
  }
  func.func @transform_3(%arg0: i32, %arg1: i32) -> (i32, i32, i32) {
    %c0_i32 = arith.constant 0 : i32
    %c0_i32_0 = arith.constant 0 : i32
    %c0_i32_1 = arith.constant 0 : i32
    return %arg0, %c0_i32, %c0_i32_0 : i32, i32, i32
  }
}

</mosaic_0001>

<llo_original>
// kernel: tpu_custom_call.1
$region0: #{tpu_custom_call.1}
  #allocation0 [shape = 'u32[]', space=smem, size = 0x4, offset = 0x4, fixed_abs, tag = 'smem constant byte address 0x4 - core index']
  #allocation1 [shape = 'u32[144,128]{1,0:T(1,128)}', space=vmem, size = 0x12000, scoped, tag = 'internal scratch']
  #allocation2 [shape = 'f32[256,1]{1,0:T(8,128)}', space=vmem, size = 0x20000, scoped, tag = 'scratch operand']
  %s0 = inlined_call_operand.hbm [shape: f32[2,256,256], index: 0, kind: input, shape index: {}]
  %s1 = inlined_call_operand.hbm [shape: f32[5,256], index: 1, kind: input, shape index: {}]
  %s2 = inlined_call_operand.vmem [shape: f32[5,1], index: 2, kind: input, shape index: {}]
  %s3 = inlined_call_operand.vmem [shape: f32[2,5,1], index: 3, kind: output, shape index: {}]
  %s4 = sld [smem:[#allocation0]]
  $region61: #{tpu_custom_call.1} parent=0
    _
  %s6 = ssub.s32 1, %s4
  %s7 = scalar_select 0, %s6, %s4
  $region1: #{tpu_custom_call.1} parent=0
    #allocation3 [shape = 'u8[524288]{0}', space=vmem, size = 0x80000, scoped, tag = 'input window, operand 0']
    #allocation4 [shape = 's32[2]{0}', space=sflag, size = 0x8, scoped, tag = 'scoped memory for tpu_custom_call.1']
    #allocation5 [shape = 'u8[8192]{0}', space=vmem, size = 0x2000, scoped, tag = 'input window, operand 1, single buffered']
    #allocation6 [shape = 's32[1]{0}', space=sflag, size = 0x4, scoped, tag = 'scoped memory for tpu_custom_call.1']
    %8 = vsyncpa [#allocation4], 0
    %s9 = scalar_lea.sflag [#allocation4], 1
    %10 = vsyncpa %s9, 0
    %11 = vsyncpa [#allocation6], 0
    loop: start=0, step=1, limit=4
    $region2: #{tpu_custom_call.1} parent=1 // loop_pre_header
      _
    $region3: #{tpu_custom_call.1} parent=1 // loop_header
      %s13 = sphi 0, %s17
      %p14 = scmp.ge.s32.totalorder %s13, 4
      %s20 = sphi 0, %s32
      %s21 = sphi 0, %s28
      %s22 = sphi 0, %s20
      %s23 = sphi 0, %s21
      %s24 = sphi 0, %s22
      %s25 = sphi 0, %s23
      %s37 = sphi 0, %s39
      %s40 = sphi 0, %s37
      %s41 = sphi 0, %s40
      %s57 = sphi 0, %s41
      %s61 = sphi 0, %s61
      %s63 = sphi 0, %s61
      %s64 = sphi 0, %s63
      %s78 = sphi 0, %s64
      %s82 = sphi 0, %s82
      %s84 = sphi 0, %s82
      %s85 = sphi 0, %s84
      %s99 = sphi 0, %s85
      %s105 = sphi 0, %s107
      %s108 = sphi 0, %s105
      %s109 = sphi 0, %s108
      %s125 = sphi 0, %s109
    $region4: #{tpu_custom_call.1} parent=1 // loop_header_branch
      %16 = sbr.rel (%p14) target = $region8
    $region5: #{tpu_custom_call.1} parent=1 // loop_body
      %s18 = ssub.s32 %s13, 1
      %s19 = ssub.s32 %s13, 2
      %s26 = sadd.s32 1, %s21
      %p27 = scmp.ge.s32.totalorder %s26, 1
      %s28 = scalar_select %p27, 0, %s26
      %s29 = sadd.s32 1, %s20
      %s30 = scalar_select %p27, %s29, %s20
      %p31 = scmp.ge.s32.totalorder %s30, 2
      %s32 = scalar_select %p31, 0, %s30
      %s33 = ssub.s32 %s20, %s32
      %s34 = ssub.s32 %s21, %s28
      %s35 = sor.u32 %s33, %s34
      %p36 = scmp.eq.s32.totalorder %s35, 0
      %s38 = sadd.s32 %s37, 1
      %s39 = scalar_select %p36, %s37, %s38
      %p42 = pneg %p36
      %p43 = scmp.eq.s32.totalorder %s13, 1
      %p44 = por %p42, %p43
      %p45 = scmp.ne.s32.totalorder %s37, %s40
      %p46 = scmp.eq.s32.totalorder %s13, 0
      %p47 = por %p45, %p46
      %p48 = scmp.ne.s32.totalorder %s37, %s40
      %p49 = scmp.eq.s32.totalorder %s18, 1
      %p50 = por %p48, %p49
      %p51 = scmp.ne.s32.totalorder %s40, %s41
      %p52 = scmp.eq.s32.totalorder %s18, 0
      %p53 = por %p51, %p52
      %p54 = scmp.ne.s32.totalorder %s40, %s41
      %p55 = scmp.eq.s32.totalorder %s19, 1
      %p56 = por %p54, %p55
      %p58 = scmp.ne.s32.totalorder %s41, %s57
      %p59 = scmp.eq.s32.totalorder %s19, 0
      %p60 = por %p58, %p59
      %s62 = sadd.s32 %s61, 1
      %p65 = scmp.eq.s32.totalorder %s13, 1
      %p66 = scmp.ne.s32.totalorder %s61, %s63
      %p67 = scmp.eq.s32.totalorder %s13, 0
      %p68 = por %p66, %p67
      %p69 = scmp.ne.s32.totalorder %s61, %s63
      %p70 = scmp.eq.s32.totalorder %s18, 1
      %p71 = por %p69, %p70
      %p72 = scmp.ne.s32.totalorder %s63, %s64
      %p73 = scmp.eq.s32.totalorder %s18, 0
      %p74 = por %p72, %p73
      %p75 = scmp.ne.s32.totalorder %s63, %s64
      %p76 = scmp.eq.s32.totalorder %s19, 1
      %p77 = por %p75, %p76
      %p79 = scmp.ne.s32.totalorder %s64, %s78
      %p80 = scmp.eq.s32.totalorder %s19, 0
      %p81 = por %p79, %p80
      %s83 = sadd.s32 %s82, 1
      %p86 = scmp.eq.s32.totalorder %s13, 1
      %p87 = scmp.ne.s32.totalorder %s82, %s84
      %p88 = scmp.eq.s32.totalorder %s13, 0
      %p89 = por %p87, %p88
      %p90 = scmp.ne.s32.totalorder %s82, %s84
      %p91 = scmp.eq.s32.totalorder %s18, 1
      %p92 = por %p90, %p91
      %p93 = scmp.ne.s32.totalorder %s84, %s85
      %p94 = scmp.eq.s32.totalorder %s18, 0
      %p95 = por %p93, %p94
      %p96 = scmp.ne.s32.totalorder %s84, %s85
      %p97 = scmp.eq.s32.totalorder %s19, 1
      %p98 = por %p96, %p97
      %p100 = scmp.ne.s32.totalorder %s85, %s99
      %p101 = scmp.eq.s32.totalorder %s19, 0
      %p102 = por %p100, %p101
      %s103 = ssub.s32 %s20, %s32
      %p104 = scmp.eq.s32.totalorder %s103, 0
      %s106 = sadd.s32 %s105, 1
      %s107 = scalar_select %p104, %s105, %s106
      %p110 = pneg %p104
      %p111 = scmp.eq.s32.totalorder %s13, 1
      %p112 = por %p110, %p111
      %p113 = scmp.ne.s32.totalorder %s105, %s108
      %p114 = scmp.eq.s32.totalorder %s13, 0
      %p115 = por %p113, %p114
      %p116 = scmp.ne.s32.totalorder %s105, %s108
      %p117 = scmp.eq.s32.totalorder %s18, 1
      %p118 = por %p116, %p117
      %p119 = scmp.ne.s32.totalorder %s108, %s109
      %p120 = scmp.eq.s32.totalorder %s18, 0
      %p121 = por %p119, %p120
      %p122 = scmp.ne.s32.totalorder %s108, %s109
      %p123 = scmp.eq.s32.totalorder %s19, 1
      %p124 = por %p122, %p123
      %p126 = scmp.ne.s32.totalorder %s109, %s125
      %p127 = scmp.eq.s32.totalorder %s19, 0
      %p128 = por %p126, %p127
      %p129 = scmp.le.s32.totalorder 1, %s13
      %p130 = scmp.lt.s32.totalorder %s13, 3
      %p131 = pnand %p129, %p130
      %p132 = pneg %p131
      // Predicated region
      $region9: #{tpu_custom_call.1} parent=5 // pred_check
        _
      $region10: #{tpu_custom_call.1} parent=5 // pred_check_branch
        %134 = sbr.rel (%p131) target = $region12
      $region11: #{tpu_custom_call.1} parent=5 // pred_region
        %s135 = ssub.s32 %s13, 1
        // Predicated region
        $region13: #{tpu_custom_call.1} parent=11 // pred_check
          %p136 = pneg %p74
        $region14: #{tpu_custom_call.1} parent=11 // pred_check_branch
          %138 = sbr.rel (%p136) target = $region16
        $region15: #{tpu_custom_call.1} parent=11 // pred_region
          %s140 = ssub.s32 256, 256
          %141 = vsyncadd [#allocation6], %s140
          %s143 = sshll.u32 [#allocation5], 4
          %s144 = int_to_ptr.vmem [resolvable:$true] %s143
          %146 = dma.hbm_to_vmem [thread:$0]  %s1, 256, %s144, [#allocation6]
        $region16: #{tpu_custom_call.1} parent=11 // pred_fallthru
          _
        // Predicated region
        $region17: #{tpu_custom_call.1} parent=11 // pred_check
          %p147 = pneg %p95
        $region18: #{tpu_custom_call.1} parent=11 // pred_check_branch
          %149 = sbr.rel (%p147) target = $region20
        $region19: #{tpu_custom_call.1} parent=11 // pred_region
          _
        $region20: #{tpu_custom_call.1} parent=11 // pred_fallthru
          _
      $region12: #{tpu_custom_call.1} parent=5 // pred_fallthru
        _
      %p150 = scmp.lt.s32.totalorder %s13, 2
      // Predicated region
      $region21: #{tpu_custom_call.1} parent=5 // pred_check
        %p151 = pneg %p150
      $region22: #{tpu_custom_call.1} parent=5 // pred_check_branch
        %153 = sbr.rel (%p151) target = $region24
      $region23: #{tpu_custom_call.1} parent=5 // pred_region
        // Predicated region
        $region25: #{tpu_custom_call.1} parent=23 // pred_check
          %p154 = pneg %p47
        $region26: #{tpu_custom_call.1} parent=23 // pred_check_branch
          %156 = sbr.rel (%p154) target = $region28
        $region27: #{tpu_custom_call.1} parent=23 // pred_region
          %s157 = sand.u32 %s37, 1
          %s158 = scalar_lea.sflag [#allocation4], %s157
          %s159 = sand.u32 %s37, 1
          %s160 = smul.addr %s159, 512
          %s161 = scalar_lea.vmem [#allocation3], %s160
          %s162 = smul.u32 2, %s21
          %s164 = ssub.s32 8192, 8192
          %165 = vsyncadd %s158, %s164
          %s166 = smul.addr %s20, 64
          %s167 = sadd.s32 %s162, %s166
          %s168 = smul.addr %s167, 128
          %s169 = scalar_lea.hbm %s0, %s168
          %s170 = sshll.u32 %s161, 4
          %s171 = int_to_ptr.vmem [resolvable:$true] %s170
          %176 = dma.hbm_to_vmem [thread:$0]  %s169, 8192, %s171, %s158, 256, 256, 16
        $region28: #{tpu_custom_call.1} parent=23 // pred_fallthru
          _
      $region24: #{tpu_custom_call.1} parent=5 // pred_fallthru
        _
      %p177 = scmp.le.s32.totalorder 1, %s13
      %p178 = scmp.lt.s32.totalorder %s13, 3
      %p179 = pnand %p177, %p178
      %p180 = pneg %p179
      // Predicated region
      $region29: #{tpu_custom_call.1} parent=5 // pred_check
        _
      $region30: #{tpu_custom_call.1} parent=5 // pred_check_branch
        %182 = sbr.rel (%p179) target = $region32
      $region31: #{tpu_custom_call.1} parent=5 // pred_region
        %s183 = ssub.s32 %s13, 1
        %s184 = sand.u32 %s40, 1
        %s185 = scalar_lea.sflag [#allocation4], %s184
        %s186 = sand.u32 %s40, 1
        %s187 = smul.addr %s186, 512
        %s188 = scalar_lea.vmem [#allocation3], %s187
        // Predicated region
        $region33: #{tpu_custom_call.1} parent=31 // pred_check
          %p189 = pneg %p53
        $region34: #{tpu_custom_call.1} parent=31 // pred_check_branch
          %191 = sbr.rel (%p189) target = $region36
        $region35: #{tpu_custom_call.1} parent=31 // pred_region
          %192 = dma.done %s185, 8192
        $region36: #{tpu_custom_call.1} parent=31 // pred_fallthru
          _
        // Predicated region
        $region37: #{tpu_custom_call.1} parent=31 // pred_check
          %p193 = pneg %p74
        $region38: #{tpu_custom_call.1} parent=31 // pred_check_branch
          %195 = sbr.rel (%p193) target = $region40
        $region39: #{tpu_custom_call.1} parent=31 // pred_region
          %196 = dma.done [#allocation6], 256
        $region40: #{tpu_custom_call.1} parent=31 // pred_fallthru
          _
        %s197 = sand.u32 %s40, 1
        %s198 = scalar_lea.sflag [#allocation4], %s197
        %s199 = sand.u32 %s40, 1
        %s200 = smul.addr %s199, 512
        %s201 = scalar_lea.vmem [#allocation3], %s200
        %p202 = pneg %p53
        %p203 = pneg %p50
        %p204 = pneg %p74
        %p205 = pneg %p71
        %p206 = pneg %p95
        %p207 = pneg %p92
        %p208 = pneg %p121
        %p209 = pneg %p118
        %p210 = scmp.lt.s32.totalorder %s22, 1
        %s211 = scalar_select %p210, %s22, 1
        %s212 = smul.addr %s211, 8
        %s213 = scalar_lea.vmem %s3, %s212
        %s214 = smul.u32 2, %s23
        %p215 = scmp.lt.s32.totalorder %s22, 1
        %s216 = scalar_select %p215, %s22, 1
        %s217 = smul.addr %s216, 8
        %s218 = scalar_lea.vmem %s3, %s217
        %p219 = scmp.eq.s32.totalorder %s23, 0
        // Predicated region
        $region41: #{tpu_custom_call.1} parent=31 // pred_check
          %p220 = pneg %p219
        $region42: #{tpu_custom_call.1} parent=31 // pred_check_branch
          %222 = sbr.rel (%p220) target = $region44
        $region43: #{tpu_custom_call.1} parent=31 // pred_region
          %vm223 = vcmask 7168
          %224 = vst.msk [vmem:[#allocation2] sm:$0xff] %vm223, 0.0
          %225 = vst.msk [vmem:[#allocation2 + $0x8] sm:$0xff] %vm223, 0.0
          %226 = vst.msk [vmem:[#allocation2 + $0x10] sm:$0xff] %vm223, 0.0
          %227 = vst.msk [vmem:[#allocation2 + $0x18] sm:$0xff] %vm223, 0.0
          %228 = vst.msk [vmem:[#allocation2 + $0x20] sm:$0xff] %vm223, 0.0
          %229 = vst.msk [vmem:[#allocation2 + $0x28] sm:$0xff] %vm223, 0.0
          %230 = vst.msk [vmem:[#allocation2 + $0x30] sm:$0xff] %vm223, 0.0
          %231 = vst.msk [vmem:[#allocation2 + $0x38] sm:$0xff] %vm223, 0.0
          %232 = vst.msk [vmem:[#allocation2 + $0x40] sm:$0xff] %vm223, 0.0
          %233 = vst.msk [vmem:[#allocation2 + $0x48] sm:$0xff] %vm223, 0.0
          %234 = vst.msk [vmem:[#allocation2 + $0x50] sm:$0xff] %vm223, 0.0
          %235 = vst.msk [vmem:[#allocation2 + $0x58] sm:$0xff] %vm223, 0.0
          %236 = vst.msk [vmem:[#allocation2 + $0x60] sm:$0xff] %vm223, 0.0
          %237 = vst.msk [vmem:[#allocation2 + $0x68] sm:$0xff] %vm223, 0.0
          %238 = vst.msk [vmem:[#allocation2 + $0x70] sm:$0xff] %vm223, 0.0
          %239 = vst.msk [vmem:[#allocation2 + $0x78] sm:$0xff] %vm223, 0.0
          %240 = vst.msk [vmem:[#allocation2 + $0x80] sm:$0xff] %vm223, 0.0
          %241 = vst.msk [vmem:[#allocation2 + $0x88] sm:$0xff] %vm223, 0.0
          %242 = vst.msk [vmem:[#allocation2 + $0x90] sm:$0xff] %vm223, 0.0
          %243 = vst.msk [vmem:[#allocation2 + $0x98] sm:$0xff] %vm223, 0.0
          %244 = vst.msk [vmem:[#allocation2 + $0xa0] sm:$0xff] %vm223, 0.0
          %245 = vst.msk [vmem:[#allocation2 + $0xa8] sm:$0xff] %vm223, 0.0
          %246 = vst.msk [vmem:[#allocation2 + $0xb0] sm:$0xff] %vm223, 0.0
          %247 = vst.msk [vmem:[#allocation2 + $0xb8] sm:$0xff] %vm223, 0.0
          %248 = vst.msk [vmem:[#allocation2 + $0xc0] sm:$0xff] %vm223, 0.0
          %249 = vst.msk [vmem:[#allocation2 + $0xc8] sm:$0xff] %vm223, 0.0
          %250 = vst.msk [vmem:[#allocation2 + $0xd0] sm:$0xff] %vm223, 0.0
          %251 = vst.msk [vmem:[#allocation2 + $0xd8] sm:$0xff] %vm223, 0.0
          %252 = vst.msk [vmem:[#allocation2 + $0xe0] sm:$0xff] %vm223, 0.0
          %253 = vst.msk [vmem:[#allocation2 + $0xe8] sm:$0xff] %vm223, 0.0
          %254 = vst.msk [vmem:[#allocation2 + $0xf0] sm:$0xff] %vm223, 0.0
          %255 = vst.msk [vmem:[#allocation2 + $0xf8] sm:$0xff] %vm223, 0.0
        $region44: #{tpu_custom_call.1} parent=31 // pred_fallthru
          _
        %v256 = vld [vmem:[%s188] sm:$0xff]
        %v257 = vld [vmem:[%s188 + $0x8] sm:$0xff]
        %v258 = vld [vmem:[%s188 + $0x10] sm:$0xff]
        %v259 = vld [vmem:[%s188 + $0x18] sm:$0xff]
        %v260 = vld [vmem:[%s188 + $0x20] sm:$0xff]
        %v261 = vld [vmem:[%s188 + $0x28] sm:$0xff]
        %v262 = vld [vmem:[%s188 + $0x30] sm:$0xff]
        %v263 = vld [vmem:[%s188 + $0x38] sm:$0xff]
        %v264 = vld [vmem:[%s188 + $0x40] sm:$0xff]
        %v265 = vld [vmem:[%s188 + $0x48] sm:$0xff]
        %v266 = vld [vmem:[%s188 + $0x50] sm:$0xff]
        %v267 = vld [vmem:[%s188 + $0x58] sm:$0xff]
        %v268 = vld [vmem:[%s188 + $0x60] sm:$0xff]
        %v269 = vld [vmem:[%s188 + $0x68] sm:$0xff]
        %v270 = vld [vmem:[%s188 + $0x70] sm:$0xff]
        %v271 = vld [vmem:[%s188 + $0x78] sm:$0xff]
        %v272 = vld [vmem:[%s188 + $0x80] sm:$0xff]
        %v273 = vld [vmem:[%s188 + $0x88] sm:$0xff]
        %v274 = vld [vmem:[%s188 + $0x90] sm:$0xff]
        %v275 = vld [vmem:[%s188 + $0x98] sm:$0xff]
        %v276 = vld [vmem:[%s188 + $0xa0] sm:$0xff]
        %v277 = vld [vmem:[%s188 + $0xa8] sm:$0xff]
        %v278 = vld [vmem:[%s188 + $0xb0] sm:$0xff]
        %v279 = vld [vmem:[%s188 + $0xb8] sm:$0xff]
        %v280 = vld [vmem:[%s188 + $0xc0] sm:$0xff]
        %v281 = vld [vmem:[%s188 + $0xc8] sm:$0xff]
        %v282 = vld [vmem:[%s188 + $0xd0] sm:$0xff]
        %v283 = vld [vmem:[%s188 + $0xd8] sm:$0xff]
        %v284 = vld [vmem:[%s188 + $0xe0] sm:$0xff]
        %v285 = vld [vmem:[%s188 + $0xe8] sm:$0xff]
        %v286 = vld [vmem:[%s188 + $0xf0] sm:$0xff]
        %v287 = vld [vmem:[%s188 + $0xf8] sm:$0xff]
        %v288 = vld [vmem:[%s188 + $0x100] sm:$0xff]
        %v289 = vld [vmem:[%s188 + $0x108] sm:$0xff]
        %v290 = vld [vmem:[%s188 + $0x110] sm:$0xff]
        %v291 = vld [vmem:[%s188 + $0x118] sm:$0xff]
        %v292 = vld [vmem:[%s188 + $0x120] sm:$0xff]
        %v293 = vld [vmem:[%s188 + $0x128] sm:$0xff]
        %v294 = vld [vmem:[%s188 + $0x130] sm:$0xff]
        %v295 = vld [vmem:[%s188 + $0x138] sm:$0xff]
        %v296 = vld [vmem:[%s188 + $0x140] sm:$0xff]
        %v297 = vld [vmem:[%s188 + $0x148] sm:$0xff]
        %v298 = vld [vmem:[%s188 + $0x150] sm:$0xff]
        %v299 = vld [vmem:[%s188 + $0x158] sm:$0xff]
        %v300 = vld [vmem:[%s188 + $0x160] sm:$0xff]
        %v301 = vld [vmem:[%s188 + $0x168] sm:$0xff]
        %v302 = vld [vmem:[%s188 + $0x170] sm:$0xff]
        %v303 = vld [vmem:[%s188 + $0x178] sm:$0xff]
        %v304 = vld [vmem:[%s188 + $0x180] sm:$0xff]
        %v305 = vld [vmem:[%s188 + $0x188] sm:$0xff]
        %v306 = vld [vmem:[%s188 + $0x190] sm:$0xff]
        %v307 = vld [vmem:[%s188 + $0x198] sm:$0xff]
        %v308 = vld [vmem:[%s188 + $0x1a0] sm:$0xff]
        %v309 = vld [vmem:[%s188 + $0x1a8] sm:$0xff]
        %v310 = vld [vmem:[%s188 + $0x1b0] sm:$0xff]
        %v311 = vld [vmem:[%s188 + $0x1b8] sm:$0xff]
        %v312 = vld [vmem:[%s188 + $0x1c0] sm:$0xff]
        %v313 = vld [vmem:[%s188 + $0x1c8] sm:$0xff]
        %v314 = vld [vmem:[%s188 + $0x1d0] sm:$0xff]
        %v315 = vld [vmem:[%s188 + $0x1d8] sm:$0xff]
        %v316 = vld [vmem:[%s188 + $0x1e0] sm:$0xff]
        %v317 = vld [vmem:[%s188 + $0x1e8] sm:$0xff]
        %v318 = vld [vmem:[%s188 + $0x1f0] sm:$0xff]
        %v319 = vld [vmem:[%s188 + $0x1f8] sm:$0xff]
        %v320 = vld [vmem:[#allocation2] sm:$0xff]
        %v321 = vld [vmem:[#allocation2 + $0x8] sm:$0xff]
        %v322 = vld [vmem:[#allocation2 + $0x10] sm:$0xff]
        %v323 = vld [vmem:[#allocation2 + $0x18] sm:$0xff]
        %v324 = vld [vmem:[#allocation2 + $0x20] sm:$0xff]
        %v325 = vld [vmem:[#allocation2 + $0x28] sm:$0xff]
        %v326 = vld [vmem:[#allocation2 + $0x30] sm:$0xff]
        %v327 = vld [vmem:[#allocation2 + $0x38] sm:$0xff]
        %v328 = vld [vmem:[#allocation2 + $0x40] sm:$0xff]
        %v329 = vld [vmem:[#allocation2 + $0x48] sm:$0xff]
        %v330 = vld [vmem:[#allocation2 + $0x50] sm:$0xff]
        %v331 = vld [vmem:[#allocation2 + $0x58] sm:$0xff]
        %v332 = vld [vmem:[#allocation2 + $0x60] sm:$0xff]
        %v333 = vld [vmem:[#allocation2 + $0x68] sm:$0xff]
        %v334 = vld [vmem:[#allocation2 + $0x70] sm:$0xff]
        %v335 = vld [vmem:[#allocation2 + $0x78] sm:$0xff]
        %v336 = vld [vmem:[#allocation2 + $0x80] sm:$0xff]
        %v337 = vld [vmem:[#allocation2 + $0x88] sm:$0xff]
        %v338 = vld [vmem:[#allocation2 + $0x90] sm:$0xff]
        %v339 = vld [vmem:[#allocation2 + $0x98] sm:$0xff]
        %v340 = vld [vmem:[#allocation2 + $0xa0] sm:$0xff]
        %v341 = vld [vmem:[#allocation2 + $0xa8] sm:$0xff]
        %v342 = vld [vmem:[#allocation2 + $0xb0] sm:$0xff]
        %v343 = vld [vmem:[#allocation2 + $0xb8] sm:$0xff]
        %v344 = vld [vmem:[#allocation2 + $0xc0] sm:$0xff]
        %v345 = vld [vmem:[#allocation2 + $0xc8] sm:$0xff]
        %v346 = vld [vmem:[#allocation2 + $0xd0] sm:$0xff]
        %v347 = vld [vmem:[#allocation2 + $0xd8] sm:$0xff]
        %v348 = vld [vmem:[#allocation2 + $0xe0] sm:$0xff]
        %v349 = vld [vmem:[#allocation2 + $0xe8] sm:$0xff]
        %v350 = vld [vmem:[#allocation2 + $0xf0] sm:$0xff]
        %v351 = vld [vmem:[#allocation2 + $0xf8] sm:$0xff]
        %352 = vmatprep.subr.mxu0 0.0
        %353 = vmatpush1.msra.mxu0 1.0
        %354 = vmatprep.subr.mxu0 0.0
        %355 = vmatpush1.msra.mxu0 1.0
        %356 = vmatprep.subr.mxu0 0.0
        %357 = vmatpush1.msra.mxu0 1.0
        %358 = vmatprep.subr.mxu0 0.0
        %359 = vmatpush1.msra.mxu0 1.0
        %360 = vmatprep.subr.mxu0 0.0
        %361 = vmatpush1.msra.mxu0 1.0
        %362 = vmatprep.subr.mxu0 0.0
        %363 = vmatpush1.msra.mxu0 1.0
        %364 = vmatprep.subr.mxu0 0.0
        %365 = vmatpush1.msra.mxu0 1.0
        %366 = vmatprep.subr.mxu0 0.0
        %367 = vmatpush1.msra.mxu0 1.0
        %368 = vmatprep.subr.mxu0 0.0
        %369 = vmatpush1.msra.mxu0 1.0
        %370 = vmatprep.subr.mxu0 0.0
        %371 = vmatpush1.msra.mxu0 1.0
        %372 = vmatprep.subr.mxu0 0.0
        %373 = vmatpush1.msra.mxu0 1.0
        %374 = vmatprep.subr.mxu0 0.0
        %375 = vmatpush1.msra.mxu0 1.0
        %376 = vmatprep.subr.mxu0 0.0
        %377 = vmatpush1.msra.mxu0 1.0
        %378 = vmatprep.subr.mxu0 0.0
        %379 = vmatpush1.msra.mxu0 1.0
        %380 = vmatprep.subr.mxu0 0.0
        %381 = vmatpush1.msra.mxu0 1.0
        %382 = vmatprep.subr.mxu0 0.0
        %383 = vmatpush1.msra.mxu0 1.0
        %384 = vmatprep.subr.mxu0 0.0
        %385 = vmatpush1.msra.mxu0 1.0
        %386 = vmatprep.subr.mxu0 0.0
        %387 = vmatpush1.msra.mxu0 1.0
        %388 = vmatprep.subr.mxu0 0.0
        %389 = vmatpush1.msra.mxu0 1.0
        %390 = vmatprep.subr.mxu0 0.0
        %391 = vmatpush1.msra.mxu0 1.0
        %392 = vmatprep.subr.mxu0 0.0
        %393 = vmatpush1.msra.mxu0 1.0
        %394 = vmatprep.subr.mxu0 0.0
        %395 = vmatpush1.msra.mxu0 1.0
        %396 = vmatprep.subr.mxu0 0.0
        %397 = vmatpush1.msra.mxu0 1.0
        %398 = vmatprep.subr.mxu0 0.0
        %399 = vmatpush1.msra.mxu0 1.0
        %400 = vmatprep.subr.mxu0 0.0
        %401 = vmatpush1.msra.mxu0 1.0
        %402 = vmatprep.subr.mxu0 0.0
        %403 = vmatpush1.msra.mxu0 1.0
        %404 = vmatprep.subr.mxu0 0.0
        %405 = vmatpush1.msra.mxu0 1.0
        %406 = vmatprep.subr.mxu0 0.0
        %407 = vmatpush1.msra.mxu0 1.0
        %408 = vmatprep.subr.mxu0 0.0
        %409 = vmatpush1.msra.mxu0 1.0
        %410 = vmatprep.subr.mxu0 0.0
        %411 = vmatpush1.msra.mxu0 1.0
        %412 = vmatprep.subr.mxu0 0.0
        %413 = vmatpush1.msra.mxu0 1.0
        %414 = vmatprep.subr.mxu0 0.0
        %415 = vmatpush1.msra.mxu0 1.0
        %416 = vmatprep.mubr.f32.mxu0 %v257
        %417 = vmatmul.mubr.f32.gmra.mrb[0].mxu0 %v256
        %v418 = vpop.f32.mrb[0].mxu0
        %v419 = vadd.f32 0.0, %v418
        %v420 = vpop.f32.mrb[0].mxu0
        %421 = vmatprep.mubr.f32.mxu0 %v259
        %422 = vmatmul.mubr.f32.gmra.mrb[0].mxu0 %v258
        %v423 = vpop.f32.mrb[0].mxu0
        %v424 = vadd.f32 0.0, %v423
        %v425 = vpop.f32.mrb[0].mxu0
        %426 = vmatprep.mubr.f32.mxu0 %v261
        %427 = vmatmul.mubr.f32.gmra.mrb[0].mxu0 %v260
        %v428 = vpop.f32.mrb[0].mxu0
        %v429 = vadd.f32 0.0, %v428
        %v430 = vpop.f32.mrb[0].mxu0
        %431 = vmatprep.mubr.f32.mxu0 %v263
        %432 = vmatmul.mubr.f32.gmra.mrb[0].mxu0 %v262
        %v433 = vpop.f32.mrb[0].mxu0
        %v434 = vadd.f32 0.0, %v433
        %v435 = vpop.f32.mrb[0].mxu0
        %436 = vmatprep.mubr.f32.mxu0 %v265
        %437 = vmatmul.mubr.f32.gmra.mrb[0].mxu0 %v264
        %v438 = vpop.f32.mrb[0].mxu0
        %v439 = vadd.f32 0.0, %v438
        %v440 = vpop.f32.mrb[0].mxu0
        %441 = vmatprep.mubr.f32.mxu0 %v267
        %442 = vmatmul.mubr.f32.gmra.mrb[0].mxu0 %v266
        %v443 = vpop.f32.mrb[0].mxu0
        %v444 = vadd.f32 0.0, %v443
        %v445 = vpop.f32.mrb[0].mxu0
        %446 = vmatprep.mubr.f32.mxu0 %v269
        %447 = vmatmul.mubr.f32.gmra.mrb[0].mxu0 %v268
        %v448 = vpop.f32.mrb[0].mxu0
        %v449 = vadd.f32 0.0, %v448
        %v450 = vpop.f32.mrb[0].mxu0
        %451 = vmatprep.mubr.f32.mxu0 %v271
        %452 = vmatmul.mubr.f32.gmra.mrb[0].mxu0 %v270
        %v453 = vpop.f32.mrb[0].mxu0
        %v454 = vadd.f32 0.0, %v453
        %v455 = vpop.f32.mrb[0].mxu0
        %456 = vmatprep.mubr.f32.mxu0 %v273
        %457 = vmatmul.mubr.f32.gmra.mrb[0].mxu0 %v272
        %v458 = vpop.f32.mrb[0].mxu0
        %v459 = vadd.f32 0.0, %v458
        %v460 = vpop.f32.mrb[0].mxu0
        %461 = vmatprep.mubr.f32.mxu0 %v275
        %462 = vmatmul.mubr.f32.gmra.mrb[0].mxu0 %v274
        %v463 = vpop.f32.mrb[0].mxu0
        %v464 = vadd.f32 0.0, %v463
        %v465 = vpop.f32.mrb[0].mxu0
        %466 = vmatprep.mubr.f32.mxu0 %v277
        %467 = vmatmul.mubr.f32.gmra.mrb[0].mxu0 %v276
        %v468 = vpop.f32.mrb[0].mxu0
        %v469 = vadd.f32 0.0, %v468
        %v470 = vpop.f32.mrb[0].mxu0
        %471 = vmatprep.mubr.f32.mxu0 %v279
        %472 = vmatmul.mubr.f32.gmra.mrb[0].mxu0 %v278
        %v473 = vpop.f32.mrb[0].mxu0
        %v474 = vadd.f32 0.0, %v473
        %v475 = vpop.f32.mrb[0].mxu0
        %476 = vmatprep.mubr.f32.mxu0 %v281
        %477 = vmatmul.mubr.f32.gmra.mrb[0].mxu0 %v280
        %v478 = vpop.f32.mrb[0].mxu0
        %v479 = vadd.f32 0.0, %v478
        %v480 = vpop.f32.mrb[0].mxu0
        %481 = vmatprep.mubr.f32.mxu0 %v283
        %482 = vmatmul.mubr.f32.gmra.mrb[0].mxu0 %v282
        %v483 = vpop.f32.mrb[0].mxu0
        %v484 = vadd.f32 0.0, %v483
        %v485 = vpop.f32.mrb[0].mxu0
        %486 = vmatprep.mubr.f32.mxu0 %v285
        %487 = vmatmul.mubr.f32.gmra.mrb[0].mxu0 %v284
        %v488 = vpop.f32.mrb[0].mxu0
        %v489 = vadd.f32 0.0, %v488
        %v490 = vpop.f32.mrb[0].mxu0
        %491 = vmatprep.mubr.f32.mxu0 %v287
        %492 = vmatmul.mubr.f32.gmra.mrb[0].mxu0 %v286
        %v493 = vpop.f32.mrb[0].mxu0
        %v494 = vadd.f32 0.0, %v493
        %v495 = vpop.f32.mrb[0].mxu0
        %496 = vmatprep.mubr.f32.mxu0 %v289
        %497 = vmatmul.mubr.f32.gmra.mrb[0].mxu0 %v288
        %v498 = vpop.f32.mrb[0].mxu0
        %v499 = vadd.f32 0.0, %v498
        %v500 = vpop.f32.mrb[0].mxu0
        %501 = vmatprep.mubr.f32.mxu0 %v291
        %502 = vmatmul.mubr.f32.gmra.mrb[0].mxu0 %v290
        %v503 = vpop.f32.mrb[0].mxu0
        %v504 = vadd.f32 0.0, %v503
        %v505 = vpop.f32.mrb[0].mxu0
        %506 = vmatprep.mubr.f32.mxu0 %v293
        %507 = vmatmul.mubr.f32.gmra.mrb[0].mxu0 %v292
        %v508 = vpop.f32.mrb[0].mxu0
        %v509 = vadd.f32 0.0, %v508
        %v510 = vpop.f32.mrb[0].mxu0
        %511 = vmatprep.mubr.f32.mxu0 %v295
        %512 = vmatmul.mubr.f32.gmra.mrb[0].mxu0 %v294
        %v513 = vpop.f32.mrb[0].mxu0
        %v514 = vadd.f32 0.0, %v513
        %v515 = vpop.f32.mrb[0].mxu0
        %516 = vmatprep.mubr.f32.mxu0 %v297
        %517 = vmatmul.mubr.f32.gmra.mrb[0].mxu0 %v296
        %v518 = vpop.f32.mrb[0].mxu0
        %v519 = vadd.f32 0.0, %v518
        %v520 = vpop.f32.mrb[0].mxu0
        %521 = vmatprep.mubr.f32.mxu0 %v299
        %522 = vmatmul.mubr.f32.gmra.mrb[0].mxu0 %v298
        %v523 = vpop.f32.mrb[0].mxu0
        %v524 = vadd.f32 0.0, %v523
        %v525 = vpop.f32.mrb[0].mxu0
        %526 = vmatprep.mubr.f32.mxu0 %v301
        %527 = vmatmul.mubr.f32.gmra.mrb[0].mxu0 %v300
        %v528 = vpop.f32.mrb[0].mxu0
        %v529 = vadd.f32 0.0, %v528
        %v530 = vpop.f32.mrb[0].mxu0
        %531 = vmatprep.mubr.f32.mxu0 %v303
        %532 = vmatmul.mubr.f32.gmra.mrb[0].mxu0 %v302
        %v533 = vpop.f32.mrb[0].mxu0
        %v534 = vadd.f32 0.0, %v533
        %v535 = vpop.f32.mrb[0].mxu0
        %536 = vmatprep.mubr.f32.mxu0 %v305
        %537 = vmatmul.mubr.f32.gmra.mrb[0].mxu0 %v304
        %v538 = vpop.f32.mrb[0].mxu0
        %v539 = vadd.f32 0.0, %v538
        %v540 = vpop.f32.mrb[0].mxu0
        %541 = vmatprep.mubr.f32.mxu0 %v307
        %542 = vmatmul.mubr.f32.gmra.mrb[0].mxu0 %v306
        %v543 = vpop.f32.mrb[0].mxu0
        %v544 = vadd.f32 0.0, %v543
        %v545 = vpop.f32.mrb[0].mxu0
        %546 = vmatprep.mubr.f32.mxu0 %v309
        %547 = vmatmul.mubr.f32.gmra.mrb[0].mxu0 %v308
        %v548 = vpop.f32.mrb[0].mxu0
        %v549 = vadd.f32 0.0, %v548
        %v550 = vpop.f32.mrb[0].mxu0
        %551 = vmatprep.mubr.f32.mxu0 %v311
        %552 = vmatmul.mubr.f32.gmra.mrb[0].mxu0 %v310
        %v553 = vpop.f32.mrb[0].mxu0
        %v554 = vadd.f32 0.0, %v553
        %v555 = vpop.f32.mrb[0].mxu0
        %556 = vmatprep.mubr.f32.mxu0 %v313
        %557 = vmatmul.mubr.f32.gmra.mrb[0].mxu0 %v312
        %v558 = vpop.f32.mrb[0].mxu0
        %v559 = vadd.f32 0.0, %v558
        %v560 = vpop.f32.mrb[0].mxu0
        %561 = vmatprep.mubr.f32.mxu0 %v315
        %562 = vmatmul.mubr.f32.gmra.mrb[0].mxu0 %v314
        %v563 = vpop.f32.mrb[0].mxu0
        %v564 = vadd.f32 0.0, %v563
        %v565 = vpop.f32.mrb[0].mxu0
        %566 = vmatprep.mubr.f32.mxu0 %v317
        %567 = vmatmul.mubr.f32.gmra.mrb[0].mxu0 %v316
        %v568 = vpop.f32.mrb[0].mxu0
        %v569 = vadd.f32 0.0, %v568
        %v570 = vpop.f32.mrb[0].mxu0
        %571 = vmatprep.mubr.f32.mxu0 %v319
        %572 = vmatmul.mubr.f32.gmra.mrb[0].mxu0 %v318
        %v573 = vpop.f32.mrb[0].mxu0
        %v574 = vadd.f32 0.0, %v573
        %v575 = vpop.f32.mrb[0].mxu0
        %576 = vdwg.mxu0
        %v577 = vadd.f32 %v320, %v419
        %v578 = vadd.f32 %v321, %v424
        %v579 = vadd.f32 %v322, %v429
        %v580 = vadd.f32 %v323, %v434
        %v581 = vadd.f32 %v324, %v439
        %v582 = vadd.f32 %v325, %v444
        %v583 = vadd.f32 %v326, %v449
        %v584 = vadd.f32 %v327, %v454
        %v585 = vadd.f32 %v328, %v459
        %v586 = vadd.f32 %v329, %v464
        %v587 = vadd.f32 %v330, %v469
        %v588 = vadd.f32 %v331, %v474
        %v589 = vadd.f32 %v332, %v479
        %v590 = vadd.f32 %v333, %v484
        %v591 = vadd.f32 %v334, %v489
        %v592 = vadd.f32 %v335, %v494
        %v593 = vadd.f32 %v336, %v499
        %v594 = vadd.f32 %v337, %v504
        %v595 = vadd.f32 %v338, %v509
        %v596 = vadd.f32 %v339, %v514
        %v597 = vadd.f32 %v340, %v519
        %v598 = vadd.f32 %v341, %v524
        %v599 = vadd.f32 %v342, %v529
        %v600 = vadd.f32 %v343, %v534
        %v601 = vadd.f32 %v344, %v539
        %v602 = vadd.f32 %v345, %v544
        %v603 = vadd.f32 %v346, %v549
        %v604 = vadd.f32 %v347, %v554
        %v605 = vadd.f32 %v348, %v559
        %v606 = vadd.f32 %v349, %v564
        %v607 = vadd.f32 %v350, %v569
        %v608 = vadd.f32 %v351, %v574
        %vm609 = vcmask 7168
        %610 = vst.msk [vmem:[#allocation2] sm:$0xff] %vm609, %v577
        %611 = vst.msk [vmem:[#allocation2 + $0x8] sm:$0xff] %vm609, %v578
        %612 = vst.msk [vmem:[#allocation2 + $0x10] sm:$0xff] %vm609, %v579
        %613 = vst.msk [vmem:[#allocation2 + $0x18] sm:$0xff] %vm609, %v580
        %614 = vst.msk [vmem:[#allocation2 + $0x20] sm:$0xff] %vm609, %v581
        %615 = vst.msk [vmem:[#allocation2 + $0x28] sm:$0xff] %vm609, %v582
        %616 = vst.msk [vmem:[#allocation2 + $0x30] sm:$0xff] %vm609, %v583
        %617 = vst.msk [vmem:[#allocation2 + $0x38] sm:$0xff] %vm609, %v584
        %618 = vst.msk [vmem:[#allocation2 + $0x40] sm:$0xff] %vm609, %v585
        %619 = vst.msk [vmem:[#allocation2 + $0x48] sm:$0xff] %vm609, %v586
        %620 = vst.msk [vmem:[#allocation2 + $0x50] sm:$0xff] %vm609, %v587
        %621 = vst.msk [vmem:[#allocation2 + $0x58] sm:$0xff] %vm609, %v588
        %622 = vst.msk [vmem:[#allocation2 + $0x60] sm:$0xff] %vm609, %v589
        %623 = vst.msk [vmem:[#allocation2 + $0x68] sm:$0xff] %vm609, %v590
        %624 = vst.msk [vmem:[#allocation2 + $0x70] sm:$0xff] %vm609, %v591
        %625 = vst.msk [vmem:[#allocation2 + $0x78] sm:$0xff] %vm609, %v592
        %626 = vst.msk [vmem:[#allocation2 + $0x80] sm:$0xff] %vm609, %v593
        %627 = vst.msk [vmem:[#allocation2 + $0x88] sm:$0xff] %vm609, %v594
        %628 = vst.msk [vmem:[#allocation2 + $0x90] sm:$0xff] %vm609, %v595
        %629 = vst.msk [vmem:[#allocation2 + $0x98] sm:$0xff] %vm609, %v596
        %630 = vst.msk [vmem:[#allocation2 + $0xa0] sm:$0xff] %vm609, %v597
        %631 = vst.msk [vmem:[#allocation2 + $0xa8] sm:$0xff] %vm609, %v598
        %632 = vst.msk [vmem:[#allocation2 + $0xb0] sm:$0xff] %vm609, %v599
        %633 = vst.msk [vmem:[#allocation2 + $0xb8] sm:$0xff] %vm609, %v600
        %634 = vst.msk [vmem:[#allocation2 + $0xc0] sm:$0xff] %vm609, %v601
        %635 = vst.msk [vmem:[#allocation2 + $0xc8] sm:$0xff] %vm609, %v602
        %636 = vst.msk [vmem:[#allocation2 + $0xd0] sm:$0xff] %vm609, %v603
        %637 = vst.msk [vmem:[#allocation2 + $0xd8] sm:$0xff] %vm609, %v604
        %638 = vst.msk [vmem:[#allocation2 + $0xe0] sm:$0xff] %vm609, %v605
        %639 = vst.msk [vmem:[#allocation2 + $0xe8] sm:$0xff] %vm609, %v606
        %640 = vst.msk [vmem:[#allocation2 + $0xf0] sm:$0xff] %vm609, %v607
        %641 = vst.msk [vmem:[#allocation2 + $0xf8] sm:$0xff] %vm609, %v608
        // Predicated region
        $region45: #{tpu_custom_call.1} parent=31 // pred_check
          %p642 = pneg %p219
        $region46: #{tpu_custom_call.1} parent=31 // pred_check_branch
          %644 = sbr.rel (%p642) target = $region48
        $region47: #{tpu_custom_call.1} parent=31 // pred_region
          %v645 = vld [vmem:[#allocation5] sm:$0x1f]
          %v646 = vld [vmem:[#allocation5 + $0x8] sm:$0x1f]
          %v647 = vld [vmem:[#allocation2] sm:$0xff]
          %v648 = vld [vmem:[#allocation2 + $0x8] sm:$0xff]
          %v649 = vld [vmem:[#allocation2 + $0x10] sm:$0xff]
          %v650 = vld [vmem:[#allocation2 + $0x18] sm:$0xff]
          %v651 = vld [vmem:[#allocation2 + $0x20] sm:$0xff]
          %v652 = vld [vmem:[#allocation2 + $0x28] sm:$0xff]
          %v653 = vld [vmem:[#allocation2 + $0x30] sm:$0xff]
          %v654 = vld [vmem:[#allocation2 + $0x38] sm:$0xff]
          %v655 = vld [vmem:[#allocation2 + $0x40] sm:$0xff]
          %v656 = vld [vmem:[#allocation2 + $0x48] sm:$0xff]
          %v657 = vld [vmem:[#allocation2 + $0x50] sm:$0xff]
          %v658 = vld [vmem:[#allocation2 + $0x58] sm:$0xff]
          %v659 = vld [vmem:[#allocation2 + $0x60] sm:$0xff]
          %v660 = vld [vmem:[#allocation2 + $0x68] sm:$0xff]
          %v661 = vld [vmem:[#allocation2 + $0x70] sm:$0xff]
          %v662 = vld [vmem:[#allocation2 + $0x78] sm:$0xff]
          %v663 = vld [vmem:[#allocation2 + $0x80] sm:$0xff]
          %v664 = vld [vmem:[#allocation2 + $0x88] sm:$0xff]
          %v665 = vld [vmem:[#allocation2 + $0x90] sm:$0xff]
          %v666 = vld [vmem:[#allocation2 + $0x98] sm:$0xff]
          %v667 = vld [vmem:[#allocation2 + $0xa0] sm:$0xff]
          %v668 = vld [vmem:[#allocation2 + $0xa8] sm:$0xff]
          %v669 = vld [vmem:[#allocation2 + $0xb0] sm:$0xff]
          %v670 = vld [vmem:[#allocation2 + $0xb8] sm:$0xff]
          %v671 = vld [vmem:[#allocation2 + $0xc0] sm:$0xff]
          %v672 = vld [vmem:[#allocation2 + $0xc8] sm:$0xff]
          %v673 = vld [vmem:[#allocation2 + $0xd0] sm:$0xff]
          %v674 = vld [vmem:[#allocation2 + $0xd8] sm:$0xff]
          %v675 = vld [vmem:[#allocation2 + $0xe0] sm:$0xff]
          %v676 = vld [vmem:[#allocation2 + $0xe8] sm:$0xff]
          %v677 = vld [vmem:[#allocation2 + $0xf0] sm:$0xff]
          %v678 = vld [vmem:[#allocation2 + $0xf8] sm:$0xff]
          %v679 = vld [vmem:[%s2] sm:$0x1f]
          %680 = vmatprep.subr.mxu0 0.0
          %681 = vmatpush1.msra.mxu0 %v647
          %682 = vmatprep.subr.mxu0 0.0
          %683 = vmatpush1.msra.mxu0 %v648
          %684 = vmatprep.subr.mxu0 0.0
          %685 = vmatpush1.msra.mxu0 %v649
          %686 = vmatprep.subr.mxu0 0.0
          %687 = vmatpush1.msra.mxu0 %v650
          %688 = vmatprep.subr.mxu0 0.0
          %689 = vmatpush1.msra.mxu0 %v651
          %690 = vmatprep.subr.mxu0 0.0
          %691 = vmatpush1.msra.mxu0 %v652
          %692 = vmatprep.subr.mxu0 0.0
          %693 = vmatpush1.msra.mxu0 %v653
          %694 = vmatprep.subr.mxu0 0.0
          %695 = vmatpush1.msra.mxu0 %v654
          %696 = vmatprep.subr.mxu0 0.0
          %697 = vmatpush1.msra.mxu0 %v655
          %698 = vmatprep.subr.mxu0 0.0
          %699 = vmatpush1.msra.mxu0 %v656
          %700 = vmatprep.subr.mxu0 0.0
          %701 = vmatpush1.msra.mxu0 %v657
          %702 = vmatprep.subr.mxu0 0.0
          %703 = vmatpush1.msra.mxu0 %v658
          %704 = vmatprep.subr.mxu0 0.0
          %705 = vmatpush1.msra.mxu0 %v659
          %706 = vmatprep.subr.mxu0 0.0
          %707 = vmatpush1.msra.mxu0 %v660
          %708 = vmatprep.subr.mxu0 0.0
          %709 = vmatpush1.msra.mxu0 %v661
          %710 = vmatprep.subr.mxu0 0.0
          %711 = vmatpush1.msra.mxu0 %v662
          %712 = vmatprep.subr.mxu0 0.0
          %713 = vmatpush1.msra.mxu0 %v663
          %714 = vmatprep.subr.mxu0 0.0
          %715 = vmatpush1.msra.mxu0 %v664
          %716 = vmatprep.subr.mxu0 0.0
          %717 = vmatpush1.msra.mxu0 %v665
          %718 = vmatprep.subr.mxu0 0.0
          %719 = vmatpush1.msra.mxu0 %v666
          %720 = vmatprep.subr.mxu0 0.0
          %721 = vmatpush1.msra.mxu0 %v667
          %722 = vmatprep.subr.mxu0 0.0
          %723 = vmatpush1.msra.mxu0 %v668
          %724 = vmatprep.subr.mxu0 0.0
          %725 = vmatpush1.msra.mxu0 %v669
          %726 = vmatprep.subr.mxu0 0.0
          %727 = vmatpush1.msra.mxu0 %v670
          %728 = vmatprep.subr.mxu0 0.0
          %729 = vmatpush1.msra.mxu0 %v671
          %730 = vmatprep.subr.mxu0 0.0
          %731 = vmatpush1.msra.mxu0 %v672
          %732 = vmatprep.subr.mxu0 0.0
          %733 = vmatpush1.msra.mxu0 %v673
          %734 = vmatprep.subr.mxu0 0.0
          %735 = vmatpush1.msra.mxu0 %v674
          %736 = vmatprep.subr.mxu0 0.0
          %737 = vmatpush1.msra.mxu0 %v675
          %738 = vmatprep.subr.mxu0 0.0
          %739 = vmatpush1.msra.mxu0 %v676
          %740 = vmatprep.subr.mxu0 0.0
          %741 = vmatpush1.msra.mxu0 %v677
          %742 = vmatprep.subr.mxu0 0.0
          %743 = vmatpush1.msra.mxu0 %v678
          %744 = vmatprep.mubr.f32.mxu0 %v646
          %745 = vmatmul.mubr.f32.gmra.mrb[0].mxu0 %v645
          %v746 = vpop.f32.mrb[0].mxu0
          %v747 = vadd.f32 %v679, %v746
          %v748 = vpop.f32.mrb[0].mxu0
          %749 = vdwg.mxu0
          %v750 = vsub.f32 %v747, %v747
          %v751 = vmul.f32 %v750, 1.442695
          %v752 = vpow.pop %v751
          %v753 = vadd.f32 %v752, 0.0
          %v754 = vrcp.pop %v753
          %v755 = vmul.f32 %v752, %v754
          %vm756 = vcmask 0
          %757 = vst.msk [vmem:[%s218] sm:$0x1] %vm756, %v755
          %vm758 = vcmask 1025
          %759 = vst.msk [vmem:[%s218] sm:$0x2] %vm758, %v755
          %vm760 = vcmask 4098
          %v761 = vsel %vm760, %v747, -inf
          %v762 = vrot.slane %v761, 4
          %v763 = vmax.f32 %v761, %v762
          %v764 = vrot.slane %v763, 2
          %v765 = vmax.f32 %v763, %v764
          %v766 = vrot.slane %v765, 1
          %v767 = vmax.f32 %v765, %v766
          %v768 = vsub.f32 %v747, %v767
          %v769 = vmul.f32 %v768, 1.442695
          %v770 = vpow.pop %v769
          %v772 = vrot.slane %v770, 2
          %vm774 = vcmask 2048
          %v775 = vsel %vm774, %v772, 0.0
          %v776 = vrot.slane %v775, 4
          %v777 = vadd.f32 %v775, %v776
          %v778 = vrot.slane %v777, 2
          %v779 = vadd.f32 %v777, %v778
          %v780 = vrot.slane %v779, 1
          %v781 = vadd.f32 %v779, %v780
          %v782 = vrcp.pop %v781
          %v783 = vmul.f32 %v770, %v782
          %784 = vst.msk [vmem:[%s218] sm:$0x1c] %vm760, %v783
        $region48: #{tpu_custom_call.1} parent=31 // pred_fallthru
          _
        %p785 = scmp.lt.s32.totalorder %s22, 1
        %s786 = scalar_select %p785, %s22, 1
        %s787 = smul.addr %s786, 8
        %s788 = scalar_lea.vmem %s3, %s787
        // Predicated region
        $region49: #{tpu_custom_call.1} parent=31 // pred_check
          %p789 = pneg %p118
        $region50: #{tpu_custom_call.1} parent=31 // pred_check_branch
          %791 = sbr.rel (%p789) target = $region52
        $region51: #{tpu_custom_call.1} parent=31 // pred_region
          _
        $region52: #{tpu_custom_call.1} parent=31 // pred_fallthru
          _
      $region32: #{tpu_custom_call.1} parent=5 // pred_fallthru
        _
      %p792 = scmp.le.s32.totalorder 2, %s13
      // Predicated region
      $region53: #{tpu_custom_call.1} parent=5 // pred_check
        %p793 = pneg %p792
      $region54: #{tpu_custom_call.1} parent=5 // pred_check_branch
        %795 = sbr.rel (%p793) target = $region56
      $region55: #{tpu_custom_call.1} parent=5 // pred_region
        %s796 = ssub.s32 %s13, 2
        // Predicated region
        $region57: #{tpu_custom_call.1} parent=55 // pred_check
          %p797 = pneg %p124
        $region58: #{tpu_custom_call.1} parent=55 // pred_check_branch
          %799 = sbr.rel (%p797) target = $region60
        $region59: #{tpu_custom_call.1} parent=55 // pred_region
          %p800 = scmp.lt.s32.totalorder %s24, 1
          %s801 = scalar_select %p800, %s24, 1
          %s802 = smul.addr %s801, 8
          %s803 = scalar_lea.vmem %s3, %s802
        $region60: #{tpu_custom_call.1} parent=55 // pred_fallthru
          _
      $region56: #{tpu_custom_call.1} parent=5 // pred_fallthru
        _
    $region6: #{tpu_custom_call.1} parent=1 // loop_footer
      %s17 = sadd.s32 1, %s13
    $region7: #{tpu_custom_call.1} parent=1 // loop_footer_branch
      %12 = sbr.rel target = $region3
    $region8: #{tpu_custom_call.1} parent=1 // loop_exit
      _
    %804 = vsyncpa [#allocation4], 1
    %s805 = scalar_lea.sflag [#allocation4], 1
    %806 = vsyncpa %s805, 1
    %807 = vsyncpa [#allocation6], 1

</llo_original>
